<compile_context>
chip_gen: v5e
topology: v5e:2x2
jax: 0.10.0
libtpu: 0.0.40
codegen_flags: <defaults>
</compile_context>

<pallas_src>
import jax
import jax.numpy as jnp
from jax.experimental import pallas as pl
from jax.experimental.pallas import tpu as pltpu

SUB, LANE = 8, 128          # one f32 vreg
TB = SUB * LANE             # samples per grid step


def _gather_scores(score_ref, ids):
    """out[i, j] = scores[ids[i, j]].

    score_ref : (1, N_pad) f32 VMEM ref, N_pad a multiple of 128.
    ids       : (8, 128)  int32.
    Per 128-wide chunk: sublane-broadcast to (8,128) and lane-gather with
    take_along_axis; select the matching chunk with ids >> 7.
    """
    n_pad = score_ref.shape[1]
    n_chunks = n_pad // LANE
    lane = jnp.bitwise_and(ids, LANE - 1)                     # index within chunk

    if n_chunks == 1:
        chunk = jnp.broadcast_to(score_ref[...], (SUB, LANE))
        return jnp.take_along_axis(chunk, lane, axis=1, mode="promise_in_bounds")

    chunk_id = jnp.right_shift(ids, 7)                        # ids // 128
    acc = jnp.zeros((SUB, LANE), jnp.float32)
    for c in range(n_chunks):                                 # static unrolled loop
        chunk = jnp.broadcast_to(score_ref[:, pl.ds(c * LANE, LANE)], (SUB, LANE))
        g = jnp.take_along_axis(chunk, lane, axis=1, mode="promise_in_bounds")
        acc = acc + jnp.where(chunk_id == c, g, 0.0)
    return acc


def recsys_kernel(uid_ref, mid_ref, su_ref, sm_ref, b_ref, o_ref):
    # uid_ref / mid_ref : (1, 8, 128) int32 index tiles (full vreg per step)
    # su_ref            : (1, NU_pad) f32  precomputed user scores  (VMEM resident)
    # sm_ref            : (1, NM_pad) f32  precomputed movie scores (VMEM resident)
    # b_ref             : (1,)       f32  bias in SMEM (scalar path)
    # o_ref             : (1, 8, 128) f32 lane-dense full-vreg output tile
    uids = uid_ref[0]                                         # (8, 128)
    mids = mid_ref[0]                                         # (8, 128)

    yu = _gather_scores(su_ref, uids)                         # (8, 128)
    ym = _gather_scores(sm_ref, mids)                         # (8, 128)

    o_ref[0] = (yu + ym + b_ref[0]).astype(o_ref.dtype)


def recsys_forward(users, movies, user_table, movie_table, w, b):
    """users, movies: int [B]; user_table: [NU, E]; movie_table: [NM, E];
    w: [2E, 1]; b: [1].  Returns [B, 1] float32."""
    B = users.shape[0]
    n_users, E = user_table.shape
    n_movies, _ = movie_table.shape

    n_tiles = pl.cdiv(B, TB)
    b_pad = n_tiles * TB
    pad = b_pad - B

    users_p = jnp.pad(users.astype(jnp.int32), (0, pad)).reshape(n_tiles, SUB, LANE)
    movies_p = jnp.pad(movies.astype(jnp.int32), (0, pad)).reshape(n_tiles, SUB, LANE)

    # Hoisted loop-invariant matvecs (done once by XLA, not per grid step):
    #   su[r] = <user_table[r,:], w[:E]>,  sm[r] = <movie_table[r,:], w[E:]>
    su = (user_table.astype(jnp.float32) * w[:E, 0]).sum(axis=1)      # (NU,)
    sm = (movie_table.astype(jnp.float32) * w[E:, 0]).sum(axis=1)     # (NM,)

    nu_pad = pl.cdiv(n_users, LANE) * LANE
    nm_pad = pl.cdiv(n_movies, LANE) * LANE
    su_p = jnp.pad(su, (0, nu_pad - n_users)).reshape(1, nu_pad)
    sm_p = jnp.pad(sm, (0, nm_pad - n_movies)).reshape(1, nm_pad)
    b1 = b.reshape(1).astype(jnp.float32)

    # Kernel is tiny / stream-bound: two int32 indices in + one f32 out per
    # sample, plus the score vectors fetched once.
    flops = 6 * b_pad
    bytes_accessed = 12 * b_pad + 4 * (nu_pad + nm_pad) + 4

    out = pl.pallas_call(
        recsys_kernel,
        out_shape=jax.ShapeDtypeStruct((n_tiles, SUB, LANE), jnp.float32),
        grid=(n_tiles,),
        in_specs=[
            # full-vreg index tiles, one per grid step
            pl.BlockSpec((1, SUB, LANE), lambda i: (i, 0, 0)),
            pl.BlockSpec((1, SUB, LANE), lambda i: (i, 0, 0)),
            # precomputed score vectors: full-array blocks, constant index map
            pl.BlockSpec((1, nu_pad), lambda i: (0, 0)),
            pl.BlockSpec((1, nm_pad), lambda i: (0, 0)),
            # bias on the scalar path
            pl.BlockSpec(memory_space=pltpu.MemorySpace.SMEM),
        ],
        out_specs=pl.BlockSpec((1, SUB, LANE), lambda i: (i, 0, 0)),
        compiler_params=pltpu.CompilerParams(
            dimension_semantics=("parallel",),
            vmem_limit_bytes=32 * 1024 * 1024),
        cost_estimate=pl.CostEstimate(flops=flops, transcendentals=0,
                                      bytes_accessed=bytes_accessed),
    )(users_p, movies_p, su_p, sm_p, b1)

    return out.reshape(b_pad)[:B].reshape(B, 1)


if __name__ == "__main__":
    n_users, n_movies, n_embeddings = 10, 15, 32
    batch = 8

    key = jax.random.PRNGKey(0)
    k_u, k_m, k_w, k_b, k_ui, k_mi = jax.random.split(key, 6)

    # nn.Embedding default init: N(0, 1)
    user_table = jax.random.normal(k_u, (n_users, n_embeddings), dtype=jnp.float32)
    movie_table = jax.random.normal(k_m, (n_movies, n_embeddings), dtype=jnp.float32)

    # nn.Linear(2E, 1) default init: U(-1/sqrt(fan_in), 1/sqrt(fan_in))
    fan_in = 2 * n_embeddings
    bound = 1.0 / float(fan_in) ** 0.5
    w = jax.random.uniform(k_w, (2 * n_embeddings, 1), jnp.float32, -bound, bound)
    b = jax.random.uniform(k_b, (1,), jnp.float32, -bound, bound)

    users = jax.random.randint(k_ui, (batch,), 0, n_users, dtype=jnp.int32)
    movies = jax.random.randint(k_mi, (batch,), 0, n_movies, dtype=jnp.int32)

    out = jax.block_until_ready(
        recsys_forward(users, movies, user_table, movie_table, w, b))

    # pure-JAX reference (exact f32 elementwise form of cat([u,m]) @ w + b)
    ue = user_table[users]
    me = movie_table[movies]
    ref = ((ue * w[:n_embeddings, 0]).sum(axis=1, keepdims=True)
           + (me * w[n_embeddings:, 0]).sum(axis=1, keepdims=True) + b)

    assert out.shape == (batch, 1)
    assert jnp.allclose(out, ref, atol=1e-5, rtol=1e-5), float(jnp.abs(out - ref).max())

    print("KERNEL_OK")
</pallas_src>

<mosaic_0001>
module attributes {stable_mosaic.version = 11 : i64} {
  func.func @recsys_kernel(%arg0: i32, %arg1: memref<1x8x128xi32, #tpu.memory_space<vmem>>, %arg2: memref<1x8x128xi32, #tpu.memory_space<vmem>>, %arg3: memref<1x128xf32, #tpu.memory_space<vmem>>, %arg4: memref<1x128xf32, #tpu.memory_space<vmem>>, %arg5: memref<1xf32, #tpu.memory_space<smem>>, %arg6: memref<1x8x128xf32, #tpu.memory_space<vmem>>) attributes {dimension_semantics = [#tpu.dimension_semantics<parallel>], iteration_bounds = array<i64: 1>, scalar_prefetch = 0 : i64, scratch_operands = 0 : i64, tpu.core_type = #tpu.core_type<tc>, window_params = [{transform_indices = @transform_0, window_bounds = array<i64: 1, 8, 128>}, {transform_indices = @transform_1, window_bounds = array<i64: 1, 8, 128>}, {pipeline_mode = #tpu.pipeline_mode<synchronous>, transform_indices = @transform_2, window_bounds = array<i64: 1, 128>}, {pipeline_mode = #tpu.pipeline_mode<synchronous>, transform_indices = @transform_3, window_bounds = array<i64: 1, 128>}, {transform_indices = @transform_4, window_bounds = array<i64: 1>}, {transform_indices = @transform_5, window_bounds = array<i64: 1, 8, 128>}]} {
    %c0 = arith.constant 0 : index
    %c0_0 = arith.constant 0 : index
    %c0_1 = arith.constant 0 : index
    %0 = vector.load %arg1[%c0, %c0_0, %c0_1] : memref<1x8x128xi32, #tpu.memory_space<vmem>>, vector<1x8x128xi32>
    %1 = vector.shape_cast %0 : vector<1x8x128xi32> to vector<8x128xi32>
    %c0_2 = arith.constant 0 : index
    %c0_3 = arith.constant 0 : index
    %c0_4 = arith.constant 0 : index
    %2 = vector.load %arg2[%c0_2, %c0_3, %c0_4] : memref<1x8x128xi32, #tpu.memory_space<vmem>>, vector<1x8x128xi32>
    %3 = vector.shape_cast %2 : vector<1x8x128xi32> to vector<8x128xi32>
    %c127_i32 = arith.constant 127 : i32
    %4 = vector.broadcast %c127_i32 : i32 to vector<8x128xi32>
    %5 = arith.andi %1, %4 : vector<8x128xi32>
    %c0_5 = arith.constant 0 : index
    %c0_6 = arith.constant 0 : index
    %6 = vector.load %arg3[%c0_5, %c0_6] : memref<1x128xf32, #tpu.memory_space<vmem>>, vector<1x128xf32>
    %7 = vector.shape_cast %6 : vector<1x128xf32> to vector<1x128xf32>
    %8 = vector.broadcast %7 : vector<1x128xf32> to vector<8x128xf32>
    %9 = vector.shape_cast %5 : vector<8x128xi32> to vector<8x128x1xi32>
    %10 = vector.shape_cast %9 : vector<8x128x1xi32> to vector<8x128xi32>
    %11 = tpu.dynamic_gather %8[%10] in [1] : vector<8x128xf32>, vector<8x128xi32> -> vector<8x128xf32>
    %c127_i32_7 = arith.constant 127 : i32
    %12 = vector.broadcast %c127_i32_7 : i32 to vector<8x128xi32>
    %13 = arith.andi %3, %12 : vector<8x128xi32>
    %c0_8 = arith.constant 0 : index
    %c0_9 = arith.constant 0 : index
    %14 = vector.load %arg4[%c0_8, %c0_9] : memref<1x128xf32, #tpu.memory_space<vmem>>, vector<1x128xf32>
    %15 = vector.shape_cast %14 : vector<1x128xf32> to vector<1x128xf32>
    %16 = vector.broadcast %15 : vector<1x128xf32> to vector<8x128xf32>
    %17 = vector.shape_cast %13 : vector<8x128xi32> to vector<8x128x1xi32>
    %18 = vector.shape_cast %17 : vector<8x128x1xi32> to vector<8x128xi32>
    %19 = tpu.dynamic_gather %16[%18] in [1] : vector<8x128xf32>, vector<8x128xi32> -> vector<8x128xf32>
    %20 = arith.addf %11, %19 : vector<8x128xf32>
    %c0_10 = arith.constant 0 : index
    %21 = memref.load %arg5[%c0_10] : memref<1xf32, #tpu.memory_space<smem>>
    %22 = vector.broadcast %21 : f32 to vector<8x128xf32>
    %23 = arith.addf %20, %22 : vector<8x128xf32>
    %c0_11 = arith.constant 0 : index
    %c0_12 = arith.constant 0 : index
    %c0_13 = arith.constant 0 : index
    %24 = vector.load %arg6[%c0_11, %c0_12, %c0_13] : memref<1x8x128xf32, #tpu.memory_space<vmem>>, vector<1x8x128xf32>
    %25 = vector.shape_cast %24 : vector<1x8x128xf32> to vector<8x128xf32>
    %26 = vector.shape_cast %23 : vector<8x128xf32> to vector<1x8x128xf32>
    tpu.vector_store %arg6[%c0_11, %c0_12, %c0_13], %26 {strides = array<i32>} : memref<1x8x128xf32, #tpu.memory_space<vmem>>, vector<1x8x128xf32>,
    return
  }
  func.func @transform_0(%arg0: i32) -> (i32, i32, i32) {
    %c0_i32 = arith.constant 0 : i32
    %c0_i32_0 = arith.constant 0 : i32
    %c0_i32_1 = arith.constant 0 : i32
    return %arg0, %c0_i32, %c0_i32_0 : i32, i32, i32
  }
  func.func @transform_1(%arg0: i32) -> (i32, i32, i32) {
    %c0_i32 = arith.constant 0 : i32
    %c0_i32_0 = arith.constant 0 : i32
    %c0_i32_1 = arith.constant 0 : i32
    return %arg0, %c0_i32, %c0_i32_0 : i32, i32, i32
  }
  func.func @transform_2(%arg0: i32) -> (i32, i32) {
    %c0_i32 = arith.constant 0 : i32
    %c0_i32_0 = arith.constant 0 : i32
    %c0_i32_1 = arith.constant 0 : i32
    return %c0_i32, %c0_i32_0 : i32, i32
  }
  func.func @transform_3(%arg0: i32) -> (i32, i32) {
    %c0_i32 = arith.constant 0 : i32
    %c0_i32_0 = arith.constant 0 : i32
    %c0_i32_1 = arith.constant 0 : i32
    return %c0_i32, %c0_i32_0 : i32, i32
  }
  func.func @transform_4(%arg0: i32) -> i32 {
    %c0_i32 = arith.constant 0 : i32
    %c0_i32_0 = arith.constant 0 : i32
    return %c0_i32 : i32
  }
  func.func @transform_5(%arg0: i32) -> (i32, i32, i32) {
    %c0_i32 = arith.constant 0 : i32
    %c0_i32_0 = arith.constant 0 : i32
    %c0_i32_1 = arith.constant 0 : i32
    return %arg0, %c0_i32, %c0_i32_0 : i32, i32, i32
  }
}

</mosaic_0001>

<llo_original>
// kernel: tpu_custom_call.1
$region0: #{tpu_custom_call.1}
  #allocation0 [shape = 'u32[]', space=smem, size = 0x4, offset = 0x4, fixed_abs, tag = 'smem constant byte address 0x4 - core index']
  #allocation1 [shape = 'u32[72,128]{1,0:T(1,128)}', space=vmem, size = 0x9000, scoped, tag = 'internal scratch']
  #allocation2 [shape = 'f32[1]{0:T(128)S(6)}', space=smem, size = 0x200, scoped, tag = 'scoped memory for tpu_custom_call.1']
  %s0 = inlined_call_operand.hbm [shape: s32[1,8,128], index: 0, kind: input, shape index: {}]
  %s1 = inlined_call_operand.hbm [shape: s32[1,8,128], index: 1, kind: input, shape index: {}]
  %s2 = inlined_call_operand.vmem [shape: f32[1,128], index: 2, kind: input, shape index: {}]
  %s3 = inlined_call_operand.vmem [shape: f32[1,128], index: 3, kind: input, shape index: {}]
  %s4 = inlined_call_operand.<no memory space> [shape: f32[1], index: 4, kind: input, shape index: {}]
  %s5 = inlined_call_operand.hbm [shape: f32[1,8,128], index: 5, kind: output, shape index: {}]
  %s6 = sld [smem:[#allocation0]]
  $region38: #{tpu_custom_call.1} parent=0
    _
  %s8 = ssub.s32 1, %s6
  %s9 = scalar_select 0, %s8, %s6
  %10 = sst [smem:[#allocation2]] %s4
  $region1: #{tpu_custom_call.1} parent=0
    #allocation3 [shape = 'u8[4096]{0}', space=vmem, size = 0x1000, scoped, tag = 'input window, operand 0, single buffered']
    #allocation4 [shape = 's32[1]{0}', space=sflag, size = 0x4, scoped, tag = 'scoped memory for tpu_custom_call.1']
    #allocation5 [shape = 's32[1]{0}', space=sflag, size = 0x4, scoped, tag = 'scoped memory for tpu_custom_call.1']
    #allocation6 [shape = 'u8[4096]{0}', space=vmem, size = 0x1000, scoped, tag = 'input window, operand 1, single buffered']
    #allocation7 [shape = 's32[1]{0}', space=sflag, size = 0x4, scoped, tag = 'scoped memory for tpu_custom_call.1']
    #allocation8 [shape = 'u8[4096]{0}', space=vmem, size = 0x1000, scoped, tag = 'output window, operand 0, single buffered']
    %11 = vsyncpa [#allocation4], 0
    %12 = vsyncpa [#allocation7], 0
    %13 = vsyncpa [#allocation5], 0
    // Predicated region
    $region2: #{tpu_custom_call.1} parent=1 // pred_check
      _
    $region3: #{tpu_custom_call.1} parent=1 // pred_check_branch
      %15 = sbr.rel (0) target = $region5
    $region4: #{tpu_custom_call.1} parent=1 // pred_region
      %17 = vsyncadd [#allocation4], 0
      %s19 = sshll.u32 %s0, 4
      %s20 = int_to_ptr.hbm [resolvable:$true] %s19
      %s21 = sshll.u32 [#allocation3], 4
      %s22 = int_to_ptr.vmem [resolvable:$true] %s21
      %24 = dma.hbm_to_vmem [thread:$0]  %s20, 128, %s22, [#allocation4]
    $region5: #{tpu_custom_call.1} parent=1 // pred_fallthru
      _
    // Predicated region
    $region6: #{tpu_custom_call.1} parent=1 // pred_check
      _
    $region7: #{tpu_custom_call.1} parent=1 // pred_check_branch
      %26 = sbr.rel (0) target = $region9
    $region8: #{tpu_custom_call.1} parent=1 // pred_region
      %28 = vsyncadd [#allocation7], 0
      %s30 = sshll.u32 %s1, 4
      %s31 = int_to_ptr.hbm [resolvable:$true] %s30
      %s32 = sshll.u32 [#allocation6], 4
      %s33 = int_to_ptr.vmem [resolvable:$true] %s32
      %35 = dma.hbm_to_vmem [thread:$0]  %s31, 128, %s33, [#allocation7]
    $region9: #{tpu_custom_call.1} parent=1 // pred_fallthru
      _
    // Predicated region
    $region10: #{tpu_custom_call.1} parent=1 // pred_check
      _
    $region11: #{tpu_custom_call.1} parent=1 // pred_check_branch
      %37 = sbr.rel (0) target = $region13
    $region12: #{tpu_custom_call.1} parent=1 // pred_region
      _
    $region13: #{tpu_custom_call.1} parent=1 // pred_fallthru
      _
    // Predicated region
    $region14: #{tpu_custom_call.1} parent=1 // pred_check
      _
    $region15: #{tpu_custom_call.1} parent=1 // pred_check_branch
      %39 = sbr.rel (0) target = $region17
    $region16: #{tpu_custom_call.1} parent=1 // pred_region
      _
    $region17: #{tpu_custom_call.1} parent=1 // pred_fallthru
      _
    // Predicated region
    $region18: #{tpu_custom_call.1} parent=1 // pred_check
      _
    $region19: #{tpu_custom_call.1} parent=1 // pred_check_branch
      %41 = sbr.rel (0) target = $region21
    $region20: #{tpu_custom_call.1} parent=1 // pred_region
      _
    $region21: #{tpu_custom_call.1} parent=1 // pred_fallthru
      _
    // Predicated region
    $region22: #{tpu_custom_call.1} parent=1 // pred_check
      _
    $region23: #{tpu_custom_call.1} parent=1 // pred_check_branch
      %43 = sbr.rel (0) target = $region25
    $region24: #{tpu_custom_call.1} parent=1 // pred_region
      %45 = dma.done [#allocation4], 128
    $region25: #{tpu_custom_call.1} parent=1 // pred_fallthru
      _
    // Predicated region
    $region26: #{tpu_custom_call.1} parent=1 // pred_check
      _
    $region27: #{tpu_custom_call.1} parent=1 // pred_check_branch
      %47 = sbr.rel (0) target = $region29
    $region28: #{tpu_custom_call.1} parent=1 // pred_region
      %49 = dma.done [#allocation7], 128
    $region29: #{tpu_custom_call.1} parent=1 // pred_fallthru
      _
    %v50 = vld [vmem:[#allocation3] sm:$0xff]
    %v51 = vld [vmem:[#allocation6] sm:$0xff]
    %v52 = vand.u32 %v50, 127
    %v53 = vld [vmem:[%s2] sm:$0x1]
    %v55 = vperm.slane %v53, 0
    %57 = vset.pattern.permute.xlu0 %v52
    %58 = vperm.xlu0 %57, %v55
    %v59 = vpop.permute.xlu0 %58
    %v60 = vand.u32 %v51, 127
    %v61 = vld [vmem:[%s3] sm:$0x1]
    %v63 = vperm.slane %v61, 0
    %65 = vset.pattern.permute.xlu0 %v60
    %66 = vperm.xlu0 %65, %v63
    %v67 = vpop.permute.xlu0 %66
    %v68 = vadd.f32 %v59, %v67
    %s69 = sld [smem:[#allocation2]]
    %v70 = vstv %s69
    %v71 = vadd.f32 %v68, %v70
    %72 = vst [vmem:[#allocation8] sm:$0xff] %v71
    // Predicated region
    $region30: #{tpu_custom_call.1} parent=1 // pred_check
      _
    $region31: #{tpu_custom_call.1} parent=1 // pred_check_branch
      %74 = sbr.rel (0) target = $region33
    $region32: #{tpu_custom_call.1} parent=1 // pred_region
      %76 = vsyncadd [#allocation5], 0
      %s78 = sshll.u32 [#allocation8], 4
      %s79 = int_to_ptr.vmem [resolvable:$true] %s78
      %s80 = sshll.u32 %s5, 4
      %s81 = int_to_ptr.hbm [resolvable:$true] %s80
      %83 = dma.vmem_to_hbm [thread:$0]  %s79, 128, %s81, [#allocation5]
    $region33: #{tpu_custom_call.1} parent=1 // pred_fallthru
      _
    // Predicated region
    $region34: #{tpu_custom_call.1} parent=1 // pred_check
      _
    $region35: #{tpu_custom_call.1} parent=1 // pred_check_branch
      %85 = sbr.rel (0) target = $region37
    $region36: #{tpu_custom_call.1} parent=1 // pred_region
      %87 = dma.done [#allocation5], 128
    $region37: #{tpu_custom_call.1} parent=1 // pred_fallthru
      _
    %88 = vsyncpa [#allocation4], 1
    %89 = vsyncpa [#allocation7], 1
    %90 = vsyncpa [#allocation5], 1

</llo_original>
